<compile_context>
chip_gen: v7x
topology: tpu7x:2x2x1
jax: 0.10.0
libtpu: 0.0.40
codegen_flags: <defaults>
</compile_context>

<pallas_src>
import functools
import math

import jax
import jax.numpy as jnp
from jax.experimental import pallas as pl
from jax.experimental.pallas import tpu as pltpu

LANE = 128     # lane width: output last dim should be a multiple of this
SUBLANE = 8    # row tiles must be a multiple of the 8-sublane height


def _round_up(n, m):
    return ((n + m - 1) // m) * m


def _num_tensorcores():
    """2 TensorCores per chip on v7x (and v4 megacore), 1 on v5e/v6e."""
    try:
        kind = jax.devices()[0].device_kind.lower()
    except Exception:
        return 1
    return 2 if ("v7" in kind or "v4" in kind) else 1


def linear_relu_kernel(x_ref, w_ref, b_ref, o_ref):
    # x_ref: (bm, Kp)  w_ref: (Kp, Np)  b_ref: (1, Np)  o_ref: (bm, Np)
    xv = x_ref[...]
    wv = w_ref[...]
    if xv.dtype != wv.dtype:
        # bf16-weight path: cast the activation tile in-kernel (VPU op hidden
        # under the DMA) instead of paying a separate XLA cast pass over x.
        xv = xv.astype(wv.dtype)
    y = jnp.dot(xv, wv, preferred_element_type=jnp.float32)   # MXU, f32 acc
    y = y + b_ref[...]                                        # f32 epilogue
    o_ref[...] = jnp.maximum(y, 0.0).astype(o_ref.dtype)


def prepare_linear_params(weight, bias, compute_dtype=jnp.float32):
    """One-time layout plumbing (parameter-init time, NOT per forward).

    weight: (N, K) in PyTorch nn.Linear layout; bias: (N,).

    If N divides 128, fold = 128 // N input rows are packed into the lane
    dimension via a block-diagonal weight of shape (fold*K, fold*N == 128):
        x (M, K) --reshape--> (M/fold, fold*K) @ W_bd --> (M/fold, 128)
    which reshapes back to exactly (M, N): lane-dense output, no padding and
    no post-call slice.  Otherwise we fall back to padding N up to a multiple
    of 128 lanes (slice guarded in the wrapper).
    """
    N, K = weight.shape
    w_kn = jnp.asarray(weight, jnp.float32).T                    # (K, N)
    b = jnp.asarray(bias, jnp.float32)

    if N < LANE and LANE % N == 0:
        fold = LANE // N
        w_packed = jax.scipy.linalg.block_diag(*([w_kn] * fold))  # (fold*K, 128)
        b_packed = jnp.tile(b, fold).reshape(1, fold * N)         # (1, 128)
        n_cols = fold * N
    else:
        fold = 1
        n_cols = _round_up(N, LANE)
        w_packed = jnp.pad(w_kn, ((0, 0), (0, n_cols - N)))
        b_packed = jnp.pad(b, (0, n_cols - N)).reshape(1, n_cols)

    meta = dict(fold=fold, k=K, n=N, n_cols=n_cols)
    # Bias stays f32 (f32 epilogue on every chip); only W takes compute_dtype.
    return w_packed.astype(compute_dtype), b_packed.astype(jnp.float32), meta


def linear_relu(x, w_packed, b_packed, meta, *, out_dtype=None,
                max_block_rows=1024, force_pallas=True):
    """out = relu(x @ W.T + b) applied along the last dim of x."""
    fold, K, N, n_cols = meta["fold"], meta["k"], meta["n"], meta["n_cols"]
    *lead, k_in = x.shape
    assert k_in == K, f"in_features mismatch: {k_in} vs {K}"
    M = math.prod(lead) if lead else 1
    out_dtype = x.dtype if out_dtype is None else out_dtype

    # Tiny-problem escape: below ~4K rows this kernel is launch / per-step
    # overhead bound on every generation -- let XLA fuse relu(x @ W + b).
    if not force_pallas and M < 4096:
        y = jnp.maximum(
            x.reshape(M, K).astype(w_packed.dtype) @ w_packed[:K, :N]
            + b_packed[0, :N], 0.0)
        return y.reshape(*lead, N).astype(out_dtype)

    x2d = x.reshape(M, K)
    kp = fold * K

    # Folded row count and generation-aware row tile:
    #   v5e/v6e (1 TC): one grid step when it fits -- per-step overhead
    #     (~0.35 us) dominates this tiny kernel and 512-1024-row tiles sit at
    #     ~85% of the HBM roofline.
    #   v7x (2 TCs): >=2 blocks on the "parallel" M axis so both TensorCores
    #     (and both DMA queues) get work.
    mf = _round_up(M, fold * SUBLANE) // fold
    n_cores = _num_tensorcores()
    if n_cores >= 2 and mf >= 2 * SUBLANE:
        bm = min(_round_up(pl.cdiv(mf, n_cores), SUBLANE), max_block_rows)
    else:
        bm = min(_round_up(mf, SUBLANE), max_block_rows)
    mf_pad = _round_up(mf, bm)
    m_pad = mf_pad * fold
    if m_pad != M:
        x2d = jnp.pad(x2d, ((0, m_pad - M), (0, 0)))
    xf = x2d.reshape(mf_pad, kp)          # row-major contiguous -> free reshape
    grid_m = mf_pad // bm

    # VMEM (double-buffered): ~2*(bm*kp + bm*n_cols)*4B + kp*n_cols*4B.
    # At bm=1024, kp=256, n_cols=128 that is ~3.3 MiB -- well under the scoped
    # default (16 MiB on v5e, 32 MiB on v6e/v7x), so no vmem_limit override.
    flops = 2 * mf_pad * kp * n_cols
    bytes_accessed = (xf.size * xf.dtype.itemsize
                      + w_packed.size * w_packed.dtype.itemsize
                      + b_packed.size * 4
                      + mf_pad * n_cols * jnp.dtype(out_dtype).itemsize)

    outf = pl.pallas_call(
        linear_relu_kernel,
        out_shape=jax.ShapeDtypeStruct((mf_pad, n_cols), out_dtype),
        grid_spec=pltpu.PrefetchScalarGridSpec(
            num_scalar_prefetch=0,
            grid=(grid_m,),
            in_specs=[
                pl.BlockSpec((bm, kp), lambda i: (i, 0)),        # x: streamed
                pl.BlockSpec((kp, n_cols), lambda i: (0, 0)),    # W: resident
                pl.BlockSpec((1, n_cols), lambda i: (0, 0)),     # b: resident
            ],
            out_specs=pl.BlockSpec((bm, n_cols), lambda i: (i, 0)),
        ),
        compiler_params=pltpu.CompilerParams(
            # Independent M tiles -> megacore sharding on v7x's 2 TensorCores.
            dimension_semantics=("parallel",),
        ),
        cost_estimate=pl.CostEstimate(flops=flops, transcendentals=0,
                                      bytes_accessed=bytes_accessed),
    )(xf, w_packed, b_packed)

    if fold > 1:
        out2d = outf.reshape(m_pad, N)    # free reshape: n_cols == fold*N
        if m_pad != M:
            out2d = out2d[:M]             # only materialized when M was padded
        return out2d.reshape(*lead, N)

    # Padded-N fallback: slice only if padding actually happened.
    out2d = outf
    if m_pad != M or n_cols != N:
        out2d = out2d[:M, :N]
    return out2d.reshape(*lead, N)


if __name__ == "__main__":
    # Module hyperparameters.  The literal spec (input_channels=1,
    # input_size=1) gives a degenerate Linear(1, 1) whose example input does
    # not even match; we use small non-degenerate values consistent with the
    # module's construction:
    #   in_features  = input_size**2 * input_channels = 32
    #   out_features = input_size**2                  = 16
    input_channels = 2
    input_size = 4
    in_features = input_size ** 2 * input_channels     # 32
    out_features = input_size ** 2                      # 16

    key = jax.random.PRNGKey(0)
    kx, kw, kb = jax.random.split(key, 3)

    # Deterministic synthetic parameters (shapes match nn.Linear(in, out)).
    bound = 1.0 / (in_features ** 0.5)
    weight = jax.random.uniform(kw, (out_features, in_features),
                                jnp.float32, -bound, bound)
    bias = jax.random.uniform(kb, (out_features,), jnp.float32, -bound, bound)

    # Input: (batch, seq, in_features) -> M = 512 rows, folded to (64, 256).
    x = jax.random.normal(kx, (4, 128, in_features), jnp.float32)

    # One-time parameter layout prep: block-diagonal fold-by-8 (N=16 -> 128).
    w_f32, b_f32, meta = prepare_linear_params(weight, bias)

    fwd = jax.jit(functools.partial(linear_relu, meta=meta))
    out = fwd(x, w_f32, b_f32)
    jax.block_until_ready(out)

    # Cross-check against plain JAX reference (f32 path, tight tolerance).
    ref = jnp.maximum(x @ weight.T + bias, 0.0)
    assert out.shape == ref.shape, (out.shape, ref.shape)
    assert jnp.allclose(out, ref, atol=1e-5, rtol=1e-5)

    # bf16-weight path: W lives in bf16, x stays f32 in HBM and the tile is
    # cast to bf16 inside the kernel; f32 accumulation + f32 bias/ReLU.
    w_bf16, b_bf16, meta_bf16 = prepare_linear_params(
        weight, bias, compute_dtype=jnp.bfloat16)
    fwd_bf16 = jax.jit(functools.partial(linear_relu, meta=meta_bf16))
    out_bf16 = fwd_bf16(x, w_bf16, b_bf16)
    jax.block_until_ready(out_bf16)
    assert out_bf16.shape == ref.shape
    assert jnp.allclose(out_bf16, ref, atol=5e-2, rtol=5e-2)

    print("KERNEL_OK")
</pallas_src>

<mosaic_0001>
module attributes {stable_mosaic.version = 11 : i64} {
  func.func @linear_relu_kernel(%arg0: i32, %arg1: memref<64x256xf32, #tpu.memory_space<vmem>>, %arg2: memref<256x128xf32, #tpu.memory_space<vmem>>, %arg3: memref<1x128xf32, #tpu.memory_space<vmem>>, %arg4: memref<64x128xf32, #tpu.memory_space<vmem>>) attributes {dimension_semantics = [#tpu.dimension_semantics<parallel>], iteration_bounds = array<i64: 1>, scalar_prefetch = 0 : i64, scratch_operands = 0 : i64, tpu.core_type = #tpu.core_type<tc>, window_params = [{transform_indices = @transform_0, window_bounds = array<i64: 64, 256>}, {pipeline_mode = #tpu.pipeline_mode<synchronous>, transform_indices = @transform_1, window_bounds = array<i64: 256, 128>}, {pipeline_mode = #tpu.pipeline_mode<synchronous>, transform_indices = @transform_2, window_bounds = array<i64: 1, 128>}, {transform_indices = @transform_3, window_bounds = array<i64: 64, 128>}]} {
    %c0 = arith.constant 0 : index
    %c0_0 = arith.constant 0 : index
    %0 = vector.load %arg1[%c0, %c0_0] : memref<64x256xf32, #tpu.memory_space<vmem>>, vector<64x256xf32>
    %c0_1 = arith.constant 0 : index
    %c0_2 = arith.constant 0 : index
    %1 = vector.load %arg2[%c0_1, %c0_2] : memref<256x128xf32, #tpu.memory_space<vmem>>, vector<256x128xf32>
    %cst = arith.constant dense<0.000000e+00> : vector<64x128xf32>
    %2 = tpu.matmul %0, %1, %cst {dimension_numbers = #tpu.dot_dimension_numbers<[1], [0], [0], [1], [0, 0, 1, 1], [], []>} : vector<64x256xf32>, vector<256x128xf32>, vector<64x128xf32> -> vector<64x128xf32>
    %c0_3 = arith.constant 0 : index
    %c0_4 = arith.constant 0 : index
    %3 = vector.load %arg3[%c0_3, %c0_4] : memref<1x128xf32, #tpu.memory_space<vmem>>, vector<1x128xf32>
    %4 = vector.broadcast %3 : vector<1x128xf32> to vector<64x128xf32>
    %5 = arith.addf %2, %4 : vector<64x128xf32>
    %cst_5 = arith.constant 0.000000e+00 : f32
    %6 = vector.broadcast %cst_5 : f32 to vector<64x128xf32>
    %7 = arith.maximumf %5, %6 : vector<64x128xf32>
    %c0_6 = arith.constant 0 : index
    %c0_7 = arith.constant 0 : index
    %8 = vector.load %arg4[%c0_6, %c0_7] : memref<64x128xf32, #tpu.memory_space<vmem>>, vector<64x128xf32>
    tpu.vector_store %arg4[%c0_6, %c0_7], %7 {strides = array<i32>} : memref<64x128xf32, #tpu.memory_space<vmem>>, vector<64x128xf32>,
    return
  }
  func.func @transform_0(%arg0: i32) -> (i32, i32) {
    %c0_i32 = arith.constant 0 : i32
    %c0_i32_0 = arith.constant 0 : i32
    return %arg0, %c0_i32 : i32, i32
  }
  func.func @transform_1(%arg0: i32) -> (i32, i32) {
    %c0_i32 = arith.constant 0 : i32
    %c0_i32_0 = arith.constant 0 : i32
    %c0_i32_1 = arith.constant 0 : i32
    return %c0_i32, %c0_i32_0 : i32, i32
  }
  func.func @transform_2(%arg0: i32) -> (i32, i32) {
    %c0_i32 = arith.constant 0 : i32
    %c0_i32_0 = arith.constant 0 : i32
    %c0_i32_1 = arith.constant 0 : i32
    return %c0_i32, %c0_i32_0 : i32, i32
  }
  func.func @transform_3(%arg0: i32) -> (i32, i32) {
    %c0_i32 = arith.constant 0 : i32
    %c0_i32_0 = arith.constant 0 : i32
    return %arg0, %c0_i32 : i32, i32
  }
}

</mosaic_0001>

<llo_original>
// kernel: linear_relu.1
$region0: #{linear_relu.1}
  #allocation0 [shape = 'u32[]', space=smem, size = 0x4, offset = 0x4, fixed_abs, tag = 'smem constant byte address 0x4 - core index']
  #allocation1 [shape = 'u32[144,128]{1,0:T(1,128)}', space=vmem, size = 0x12000, scoped, tag = 'internal scratch']
  %s0 = inlined_call_operand.vmem [shape: f32[64,256], index: 0, kind: input, shape index: {}]
  %s1 = inlined_call_operand.vmem [shape: f32[256,128], index: 1, kind: input, shape index: {}]
  %s2 = inlined_call_operand.vmem [shape: f32[1,128], index: 2, kind: input, shape index: {}]
  %s3 = inlined_call_operand.vmem [shape: f32[64,128], index: 3, kind: output, shape index: {}]
  %s4 = sld [smem:[#allocation0]]
  $region22: #{linear_relu.1} parent=0
    _
  %s6 = ssub.s32 1, %s4
  %s7 = scalar_select 0, %s6, %s4
  // Predicated region
  $region2: #{linear_relu.1} parent=0 // pred_check
    _
  $region3: #{linear_relu.1} parent=0 // pred_check_branch
    %9 = sbr.rel (0) target = $region5
  $region4: #{linear_relu.1} parent=0 // pred_region
    _
  $region5: #{linear_relu.1} parent=0 // pred_fallthru
    _
  // Predicated region
  $region6: #{linear_relu.1} parent=0 // pred_check
    _
  $region7: #{linear_relu.1} parent=0 // pred_check_branch
    %11 = sbr.rel (0) target = $region9
  $region8: #{linear_relu.1} parent=0 // pred_region
    _
  $region9: #{linear_relu.1} parent=0 // pred_fallthru
    _
  // Predicated region
  $region10: #{linear_relu.1} parent=0 // pred_check
    _
  $region11: #{linear_relu.1} parent=0 // pred_check_branch
    %13 = sbr.rel (0) target = $region13
  $region12: #{linear_relu.1} parent=0 // pred_region
    _
  $region13: #{linear_relu.1} parent=0 // pred_fallthru
    _
  %v14 = vld [vmem:[%s0] sm:$0xff]
  %v15 = vld [vmem:[%s0 + $0x8] sm:$0xff]
  %v16 = vld [vmem:[%s0 + $0x10] sm:$0xff]
  %v17 = vld [vmem:[%s0 + $0x18] sm:$0xff]
  %v18 = vld [vmem:[%s0 + $0x20] sm:$0xff]
  %v19 = vld [vmem:[%s0 + $0x28] sm:$0xff]
  %v20 = vld [vmem:[%s0 + $0x30] sm:$0xff]
  %v21 = vld [vmem:[%s0 + $0x38] sm:$0xff]
  %v22 = vld [vmem:[%s0 + $0x40] sm:$0xff]
  %v23 = vld [vmem:[%s0 + $0x48] sm:$0xff]
  %v24 = vld [vmem:[%s0 + $0x50] sm:$0xff]
  %v25 = vld [vmem:[%s0 + $0x58] sm:$0xff]
  %v26 = vld [vmem:[%s0 + $0x60] sm:$0xff]
  %v27 = vld [vmem:[%s0 + $0x68] sm:$0xff]
  %v28 = vld [vmem:[%s0 + $0x70] sm:$0xff]
  %v29 = vld [vmem:[%s0 + $0x78] sm:$0xff]
  %v30 = vld [vmem:[%s1] sm:$0xff]
  %v31 = vld [vmem:[%s1 + $0x8] sm:$0xff]
  %v32 = vld [vmem:[%s1 + $0x10] sm:$0xff]
  %v33 = vld [vmem:[%s1 + $0x18] sm:$0xff]
  %v34 = vld [vmem:[%s1 + $0x20] sm:$0xff]
  %v35 = vld [vmem:[%s1 + $0x28] sm:$0xff]
  %v36 = vld [vmem:[%s1 + $0x30] sm:$0xff]
  %v37 = vld [vmem:[%s1 + $0x38] sm:$0xff]
  %v38 = vld [vmem:[%s1 + $0x40] sm:$0xff]
  %v39 = vld [vmem:[%s1 + $0x48] sm:$0xff]
  %v40 = vld [vmem:[%s1 + $0x50] sm:$0xff]
  %v41 = vld [vmem:[%s1 + $0x58] sm:$0xff]
  %v42 = vld [vmem:[%s1 + $0x60] sm:$0xff]
  %v43 = vld [vmem:[%s1 + $0x68] sm:$0xff]
  %v44 = vld [vmem:[%s1 + $0x70] sm:$0xff]
  %v45 = vld [vmem:[%s1 + $0x78] sm:$0xff]
  %v46 = vld [vmem:[%s1 + $0x80] sm:$0xff]
  %v47 = vld [vmem:[%s1 + $0x88] sm:$0xff]
  %v48 = vld [vmem:[%s1 + $0x90] sm:$0xff]
  %v49 = vld [vmem:[%s1 + $0x98] sm:$0xff]
  %v50 = vld [vmem:[%s1 + $0xa0] sm:$0xff]
  %v51 = vld [vmem:[%s1 + $0xa8] sm:$0xff]
  %v52 = vld [vmem:[%s1 + $0xb0] sm:$0xff]
  %v53 = vld [vmem:[%s1 + $0xb8] sm:$0xff]
  %v54 = vld [vmem:[%s1 + $0xc0] sm:$0xff]
  %v55 = vld [vmem:[%s1 + $0xc8] sm:$0xff]
  %v56 = vld [vmem:[%s1 + $0xd0] sm:$0xff]
  %v57 = vld [vmem:[%s1 + $0xd8] sm:$0xff]
  %v58 = vld [vmem:[%s1 + $0xe0] sm:$0xff]
  %v59 = vld [vmem:[%s1 + $0xe8] sm:$0xff]
  %v60 = vld [vmem:[%s1 + $0xf0] sm:$0xff]
  %v61 = vld [vmem:[%s1 + $0xf8] sm:$0xff]
  %v62 = vld [vmem:[%s2] sm:$0x1]
  %v64 = vlaneseq
  %v65 = vshrl.u32 %v64, 7
  %v66 = vsub.s32 0, %v65
  %v67 = vrot.slane %v62, %v66
  %69 = vmatprep.subr.mxu0 0.0
  %70 = vmatpush1.msra.mxu0 %v30
  %71 = vmatprep.subr.mxu0 0.0
  %72 = vmatpush1.msra.mxu0 %v31
  %73 = vmatprep.subr.mxu0 0.0
  %74 = vmatpush1.msra.mxu0 %v32
  %75 = vmatprep.subr.mxu0 0.0
  %76 = vmatpush1.msra.mxu0 %v33
  %77 = vmatprep.subr.mxu0 0.0
  %78 = vmatpush1.msra.mxu0 %v34
  %79 = vmatprep.subr.mxu0 0.0
  %80 = vmatpush1.msra.mxu0 %v35
  %81 = vmatprep.subr.mxu0 0.0
  %82 = vmatpush1.msra.mxu0 %v36
  %83 = vmatprep.subr.mxu0 0.0
  %84 = vmatpush1.msra.mxu0 %v37
  %85 = vmatprep.subr.mxu0 0.0
  %86 = vmatpush1.msra.mxu0 %v38
  %87 = vmatprep.subr.mxu0 0.0
  %88 = vmatpush1.msra.mxu0 %v39
  %89 = vmatprep.subr.mxu0 0.0
  %90 = vmatpush1.msra.mxu0 %v40
  %91 = vmatprep.subr.mxu0 0.0
  %92 = vmatpush1.msra.mxu0 %v41
  %93 = vmatprep.subr.mxu0 0.0
  %94 = vmatpush1.msra.mxu0 %v42
  %95 = vmatprep.subr.mxu0 0.0
  %96 = vmatpush1.msra.mxu0 %v43
  %97 = vmatprep.subr.mxu0 0.0
  %98 = vmatpush1.msra.mxu0 %v44
  %99 = vmatprep.subr.mxu0 0.0
  %100 = vmatpush1.msra.mxu0 %v45
  %101 = vmatprep.subr.mxu0 0.0
  %102 = vmatpush1.msra.mxu0 %v46
  %103 = vmatprep.subr.mxu0 0.0
  %104 = vmatpush1.msra.mxu0 %v47
  %105 = vmatprep.subr.mxu0 0.0
  %106 = vmatpush1.msra.mxu0 %v48
  %107 = vmatprep.subr.mxu0 0.0
  %108 = vmatpush1.msra.mxu0 %v49
  %109 = vmatprep.subr.mxu0 0.0
  %110 = vmatpush1.msra.mxu0 %v50
  %111 = vmatprep.subr.mxu0 0.0
  %112 = vmatpush1.msra.mxu0 %v51
  %113 = vmatprep.subr.mxu0 0.0
  %114 = vmatpush1.msra.mxu0 %v52
  %115 = vmatprep.subr.mxu0 0.0
  %116 = vmatpush1.msra.mxu0 %v53
  %117 = vmatprep.subr.mxu0 0.0
  %118 = vmatpush1.msra.mxu0 %v54
  %119 = vmatprep.subr.mxu0 0.0
  %120 = vmatpush1.msra.mxu0 %v55
  %121 = vmatprep.subr.mxu0 0.0
  %122 = vmatpush1.msra.mxu0 %v56
  %123 = vmatprep.subr.mxu0 0.0
  %124 = vmatpush1.msra.mxu0 %v57
  %125 = vmatprep.subr.mxu0 0.0
  %126 = vmatpush1.msra.mxu0 %v58
  %127 = vmatprep.subr.mxu0 0.0
  %128 = vmatpush1.msra.mxu0 %v59
  %129 = vmatprep.subr.mxu0 0.0
  %130 = vmatpush1.msra.mxu0 %v60
  %131 = vmatprep.subr.mxu0 0.0
  %132 = vmatpush1.msra.mxu0 %v61
  %133 = vmatprep.mubr.f32.mxu0 %v15
  %134 = vmatmul.mubr.f32.gmra.mrb[0].mxu0 %v14
  %v135 = vpop.f32.mrb[0].mxu0
  %v136 = vadd.f32 %v67, %v135
  %v137 = vpop.f32.mrb[0].mxu0
  %138 = vmatprep.mubr.f32.mxu0 %v17
  %139 = vmatmul.mubr.f32.gmra.mrb[0].mxu0 %v16
  %v140 = vpop.f32.mrb[0].mxu0
  %v141 = vadd.f32 %v67, %v140
  %v142 = vpop.f32.mrb[0].mxu0
  %143 = vmatprep.mubr.f32.mxu0 %v19
  %144 = vmatmul.mubr.f32.gmra.mrb[0].mxu0 %v18
  %v145 = vpop.f32.mrb[0].mxu0
  %v146 = vadd.f32 %v67, %v145
  %v147 = vpop.f32.mrb[0].mxu0
  %148 = vmatprep.mubr.f32.mxu0 %v21
  %149 = vmatmul.mubr.f32.gmra.mrb[0].mxu0 %v20
  %v150 = vpop.f32.mrb[0].mxu0
  %v151 = vadd.f32 %v67, %v150
  %v152 = vpop.f32.mrb[0].mxu0
  %153 = vmatprep.mubr.f32.mxu0 %v23
  %154 = vmatmul.mubr.f32.gmra.mrb[0].mxu0 %v22
  %v155 = vpop.f32.mrb[0].mxu0
  %v156 = vadd.f32 %v67, %v155
  %v157 = vpop.f32.mrb[0].mxu0
  %158 = vmatprep.mubr.f32.mxu0 %v25
  %159 = vmatmul.mubr.f32.gmra.mrb[0].mxu0 %v24
  %v160 = vpop.f32.mrb[0].mxu0
  %v161 = vadd.f32 %v67, %v160
  %v162 = vpop.f32.mrb[0].mxu0
  %163 = vmatprep.mubr.f32.mxu0 %v27
  %164 = vmatmul.mubr.f32.gmra.mrb[0].mxu0 %v26
  %v165 = vpop.f32.mrb[0].mxu0
  %v166 = vadd.f32 %v67, %v165
  %v167 = vpop.f32.mrb[0].mxu0
  %168 = vmatprep.mubr.f32.mxu0 %v29
  %169 = vmatmul.mubr.f32.gmra.mrb[0].mxu0 %v28
  %v170 = vpop.f32.mrb[0].mxu0
  %v171 = vadd.f32 %v67, %v170
  %v172 = vpop.f32.mrb[0].mxu0
  %173 = vdwg.mxu0
  %v174 = vmax.f32 %v136, 0.0
  %v175 = vmax.f32 %v141, 0.0
  %v176 = vmax.f32 %v146, 0.0
  %v177 = vmax.f32 %v151, 0.0
  %v178 = vmax.f32 %v156, 0.0
  %v179 = vmax.f32 %v161, 0.0
  %v180 = vmax.f32 %v166, 0.0
  %v181 = vmax.f32 %v171, 0.0
  %182 = vst [vmem:[%s3] sm:$0xff] %v174
  %183 = vst [vmem:[%s3 + $0x8] sm:$0xff] %v175
  %184 = vst [vmem:[%s3 + $0x10] sm:$0xff] %v176
  %185 = vst [vmem:[%s3 + $0x18] sm:$0xff] %v177
  %186 = vst [vmem:[%s3 + $0x20] sm:$0xff] %v178
  %187 = vst [vmem:[%s3 + $0x28] sm:$0xff] %v179
  %188 = vst [vmem:[%s3 + $0x30] sm:$0xff] %v180
  %189 = vst [vmem:[%s3 + $0x38] sm:$0xff] %v181
  // Predicated region
  $region14: #{linear_relu.1} parent=0 // pred_check
    _
  $region15: #{linear_relu.1} parent=0 // pred_check_branch
    %191 = sbr.rel (0) target = $region17
  $region16: #{linear_relu.1} parent=0 // pred_region
    _
  $region17: #{linear_relu.1} parent=0 // pred_fallthru
    _
  // Predicated region
  $region18: #{linear_relu.1} parent=0 // pred_check
    _
  $region19: #{linear_relu.1} parent=0 // pred_check_branch
    %193 = sbr.rel (0) target = $region21
  $region20: #{linear_relu.1} parent=0 // pred_region
    _
  $region21: #{linear_relu.1} parent=0 // pred_fallthru
    _

</llo_original>
